<compile_context>
chip_gen: v6e
topology: v6e:2x2x1
jax: 0.10.0
libtpu: 0.0.40
codegen_flags: <defaults>
</compile_context>

<pallas_src>
import functools

import jax
import jax.numpy as jnp
from jax.experimental import pallas as pl
from jax.experimental.pallas import tpu as pltpu


def _triplet_semihard_kernel(x_tile_ref, xT_ref, sq_col_ref, sq_row_ref,
                             lab_col_ref, lab_row_ref, out_ref, *, margin):
    # Gram tile on the MXU in the operand's dtype with f32 accumulation.  The *2 of the
    # distance formula is folded into the (TM, C) tile (exact: power of two), so
    # gram2[r, j] = 2 * <x_tile[r], x[j]> and the (TM, N) region never sees a scalar mul.
    gram2 = jax.lax.dot_general(
        x_tile_ref[...] * 2.0, xT_ref[...],
        (((1,), (0,)), ((), ())),
        preferred_element_type=jnp.float32)                        # (TM, N) f32

    # Partial squared distance ||xj||^2 - 2<xi,xj>.  The per-row ||xi||^2 constant is
    # added *after* the masked row max/min (max/min commute with a per-row constant),
    # saving one broadcast add over the whole (TM, N) region.
    d = sq_row_ref[...] - gram2                                    # (TM, N) f32

    # positive / negative masks from labels (broadcasted int compare, no cast)
    same = lab_col_ref[...] == lab_row_ref[...]                    # (TM, N) bool

    pos_part = jnp.max(jnp.where(same, d, -jnp.inf), axis=-1, keepdims=True)
    neg_part = jnp.min(jnp.where(same, jnp.inf, d), axis=-1, keepdims=True)

    sq_col = sq_col_ref[...]                                       # (TM, 1) f32
    # clamp(1e-16) + sqrt are monotone, so sqrt of the reduced squared distances equals
    # the reference's max/min over sqrt(clamp(dist_sq)).  pos_max includes the self pair
    # (distance ~1e-8), matching the reference.  A row with no negatives gives
    # neg_min = +inf -> loss 0 for that row (reference hinges against dist + 1e6).
    pos_max = jnp.sqrt(jnp.maximum(pos_part + sq_col, 1e-16))      # (TM, 1)
    neg_min = jnp.sqrt(jnp.maximum(neg_part + sq_col, 1e-16))      # (TM, 1)

    # margin_ranking_loss(neg_min, pos_max, y=1, margin) = relu(pos_max - neg_min + margin)
    out_ref[...] = jnp.maximum(pos_max - neg_min + margin, 0.0)

    # TODO(synk): pos_idx / neg_idx (argmax/argmin) from the reference are unused by the
    # returned loss value and are not emitted.


def _vmem_limit_bytes():
    """Generation-aware scoped-VMEM limit: raise v5e/v6e defaults, leave headroom on v7x."""
    try:
        cap = getattr(pltpu.get_tpu_info(), "vmem_capacity_bytes", None)
    except Exception:
        cap = None
    if cap is None:
        return 48 * 1024 * 1024            # conservative: > v5e/v6e defaults, < v7x physical
    if cap <= 64 * 1024 * 1024:            # v7x-class (64 MiB physical per TC)
        return 56 * 1024 * 1024
    return min(cap - 28 * 1024 * 1024, 100 * 1024 * 1024)   # v5e / v6e (128 MiB physical)


def _pick_row_tile(n, c, itemsize, vmem_budget):
    """Largest row tile whose working set fits the VMEM budget.

    Working set ~= resident (C, N) operand + sq/lab rows (single-buffered)
                 + double-buffered (TM, C) row tile
                 + ~4 live (TM, N) f32 intermediates (gram, d, two masked selects)
                 + small (TM, 1) column/output blocks.
    """
    divisors = [t for t in (512, 256, 128, 64, 32, 16, 8) if n % t == 0]
    if not divisors:
        return n                           # full-height single block (satisfies (8,128) rule)
    resident = n * c * itemsize + 2 * n * 4
    for tm in divisors:
        per_step = (2 * tm * c * itemsize
                    + 4 * tm * n * 4
                    + 6 * tm * 4)
        if resident + per_step <= vmem_budget:
            return tm
    return divisors[-1]


def _invariant_spec(block_shape):
    """BlockSpec for a grid-invariant resident block: single-buffer it."""
    index_map = lambda i: (0, 0)
    try:
        return pl.BlockSpec(block_shape, index_map, pipeline_mode=pl.Buffered(1))
    except TypeError:  # pragma: no cover - older JAX without pipeline_mode on BlockSpec
        return pl.BlockSpec(block_shape, index_map)


def triplet_semihard_loss(x, target, margin=0.0, size_average=True, matmul_dtype=None):
    """Pallas implementation of TripletSemihardLoss.forward.

    matmul_dtype: optional dtype (e.g. jnp.bfloat16) used only for the gram matmul on the
    MXU; squared norms and all post-matmul math stay f32.  None keeps the native dtype.
    """
    n, c = x.shape

    x_mm = x if matmul_dtype is None else x.astype(matmul_dtype)
    xT = x_mm.T                                            # (C, N), one-time relayout in XLA
    itemsize = jnp.dtype(x_mm.dtype).itemsize

    vmem_limit = _vmem_limit_bytes()
    tm = _pick_row_tile(n, c, itemsize, int(vmem_limit * 0.75))
    grid = (n // tm,)

    # Tiny one-shot wrapper ops: f32 squared norms and row/column label views.
    sq = jnp.sum(jnp.square(x.astype(jnp.float32)), axis=1)
    sq_col = sq.reshape(n, 1)
    sq_row = sq.reshape(1, n)
    lab = target.astype(jnp.int32)
    lab_col = lab.reshape(n, 1)
    lab_row = lab.reshape(1, n)

    per_row = pl.pallas_call(
        functools.partial(_triplet_semihard_kernel, margin=float(margin)),
        out_shape=jax.ShapeDtypeStruct((n, 1), jnp.float32),
        grid_spec=pltpu.PrefetchScalarGridSpec(
            num_scalar_prefetch=0,
            grid=grid,
            in_specs=[
                pl.BlockSpec((tm, c), lambda i: (i, 0)),   # x row tile (matmul dtype)
                _invariant_spec((c, n)),                   # x^T, resident, single-buffered
                pl.BlockSpec((tm, 1), lambda i: (i, 0)),   # ||x||^2 column tile
                _invariant_spec((1, n)),                   # ||x||^2 row, resident
                pl.BlockSpec((tm, 1), lambda i: (i, 0)),   # labels column tile
                _invariant_spec((1, n)),                   # labels row, resident
            ],
            out_specs=pl.BlockSpec((tm, 1), lambda i: (i, 0)),
        ),
        compiler_params=pltpu.CompilerParams(
            # No cross-step state -> the row-tile axis shards across v7x's two TCs.
            dimension_semantics=("parallel",),
            vmem_limit_bytes=vmem_limit),
    )(x_mm, xT, sq_col, sq_row, lab_col, lab_row)

    # TODO(synk): for N large enough that the resident (C, N) operand no longer fits VMEM
    # (earliest on v7x's 64 MiB), add a second (column) grid axis over N with running
    # (TM, 1) max/min carries (reduction axis last, "arbitrary").
    total = jnp.sum(per_row)
    return total / n if size_average else total


def _reference_loss(x, target, margin=0.0):
    y = target.astype(jnp.int32)[:, None]
    same_id = (y == y.T).astype(jnp.float32)
    sq = jnp.sum(x * x, axis=1, keepdims=True)
    dist_sq = sq + sq.T - 2.0 * (x @ x.T)
    dist = jnp.sqrt(jnp.clip(dist_sq, 1e-16))
    pos_max = jnp.max(dist - 1e6 * (1.0 - same_id), axis=-1)
    neg_min = jnp.min(dist + 1e6 * same_id, axis=-1)
    return jnp.mean(jnp.maximum(pos_max - neg_min + margin, 0.0))


if __name__ == "__main__":
    key = jax.random.PRNGKey(0)
    kx, kt = jax.random.split(key)
    N, C = 8, 32
    x = jax.random.normal(kx, (N, C), dtype=jnp.float32)
    target = jax.random.randint(kt, (N,), 0, 3, dtype=jnp.int32)

    loss = triplet_semihard_loss(x, target, margin=0.0)
    loss = jax.block_until_ready(loss)

    ref = _reference_loss(x, target, margin=0.0)
    assert jnp.allclose(loss, ref, rtol=1e-5, atol=1e-5), (loss, ref)
    print("KERNEL_OK")
</pallas_src>

<mosaic_0001>
module attributes {stable_mosaic.version = 11 : i64} {
  func.func @_triplet_semihard_kernel(%arg0: i32, %arg1: memref<8x32xf32, #tpu.memory_space<vmem>>, %arg2: memref<32x8xf32, #tpu.memory_space<vmem>>, %arg3: memref<8x1xf32, #tpu.memory_space<vmem>>, %arg4: memref<1x8xf32, #tpu.memory_space<vmem>>, %arg5: memref<8x1xi32, #tpu.memory_space<vmem>>, %arg6: memref<1x8xi32, #tpu.memory_space<vmem>>, %arg7: memref<8x1xf32, #tpu.memory_space<vmem>>) attributes {dimension_semantics = [#tpu.dimension_semantics<parallel>], iteration_bounds = array<i64: 1>, scalar_prefetch = 0 : i64, scratch_operands = 0 : i64, tpu.core_type = #tpu.core_type<tc>, window_params = [{transform_indices = @transform_0, window_bounds = array<i64: 8, 32>}, {pipeline_mode = #tpu.pipeline_mode<synchronous>, transform_indices = @transform_1, window_bounds = array<i64: 32, 8>}, {transform_indices = @transform_2, window_bounds = array<i64: 8, 1>}, {pipeline_mode = #tpu.pipeline_mode<synchronous>, transform_indices = @transform_3, window_bounds = array<i64: 1, 8>}, {transform_indices = @transform_4, window_bounds = array<i64: 8, 1>}, {pipeline_mode = #tpu.pipeline_mode<synchronous>, transform_indices = @transform_5, window_bounds = array<i64: 1, 8>}, {transform_indices = @transform_6, window_bounds = array<i64: 8, 1>}]} {
    %c0 = arith.constant 0 : index
    %c0_0 = arith.constant 0 : index
    %0 = vector.load %arg1[%c0, %c0_0] : memref<8x32xf32, #tpu.memory_space<vmem>>, vector<8x32xf32>
    %cst = arith.constant 2.000000e+00 : f32
    %1 = vector.broadcast %cst : f32 to vector<8x32xf32>
    %2 = arith.mulf %0, %1 : vector<8x32xf32>
    %c0_1 = arith.constant 0 : index
    %c0_2 = arith.constant 0 : index
    %3 = vector.load %arg2[%c0_1, %c0_2] : memref<32x8xf32, #tpu.memory_space<vmem>>, vector<32x8xf32>
    %cst_3 = arith.constant dense<0.000000e+00> : vector<8x8xf32>
    %4 = tpu.matmul %2, %3, %cst_3 {dimension_numbers = #tpu.dot_dimension_numbers<[1], [0], [0], [1], [0, 0, 1, 1], [], []>} : vector<8x32xf32>, vector<32x8xf32>, vector<8x8xf32> -> vector<8x8xf32>
    %c0_4 = arith.constant 0 : index
    %c0_5 = arith.constant 0 : index
    %5 = vector.load %arg4[%c0_4, %c0_5] : memref<1x8xf32, #tpu.memory_space<vmem>>, vector<1x8xf32>
    %6 = vector.broadcast %5 : vector<1x8xf32> to vector<8x8xf32>
    %7 = arith.subf %6, %4 : vector<8x8xf32>
    %c0_6 = arith.constant 0 : index
    %c0_7 = arith.constant 0 : index
    %8 = vector.load %arg5[%c0_6, %c0_7] : memref<8x1xi32, #tpu.memory_space<vmem>>, vector<8x1xi32>
    %c0_8 = arith.constant 0 : index
    %c0_9 = arith.constant 0 : index
    %9 = vector.load %arg6[%c0_8, %c0_9] : memref<1x8xi32, #tpu.memory_space<vmem>>, vector<1x8xi32>
    %10 = vector.broadcast %8 : vector<8x1xi32> to vector<8x8xi32>
    %11 = vector.broadcast %9 : vector<1x8xi32> to vector<8x8xi32>
    %12 = arith.cmpi eq, %10, %11 : vector<8x8xi32>
    %cst_10 = arith.constant 0xFF800000 : f32
    %13 = vector.broadcast %cst_10 : f32 to vector<8x8xf32>
    %14 = arith.select %12, %7, %13 : vector<8x8xi1>, vector<8x8xf32>
    %cst_11 = arith.constant dense<0xFF800000> : vector<8xf32>
    %15 = vector.multi_reduction <maximumf>, %14, %cst_11 [1] : vector<8x8xf32> to vector<8xf32>
    %16 = vector.shape_cast %15 : vector<8xf32> to vector<8x1xf32>
    %cst_12 = arith.constant 0x7F800000 : f32
    %17 = vector.broadcast %cst_12 : f32 to vector<8x8xf32>
    %18 = arith.select %12, %17, %7 : vector<8x8xi1>, vector<8x8xf32>
    %cst_13 = arith.constant dense<0x7F800000> : vector<8xf32>
    %19 = vector.multi_reduction <minimumf>, %18, %cst_13 [1] : vector<8x8xf32> to vector<8xf32>
    %20 = vector.shape_cast %19 : vector<8xf32> to vector<8x1xf32>
    %c0_14 = arith.constant 0 : index
    %c0_15 = arith.constant 0 : index
    %21 = vector.load %arg3[%c0_14, %c0_15] : memref<8x1xf32, #tpu.memory_space<vmem>>, vector<8x1xf32>
    %22 = arith.addf %16, %21 : vector<8x1xf32>
    %cst_16 = arith.constant 1.000000e-16 : f32
    %23 = vector.broadcast %cst_16 : f32 to vector<8x1xf32>
    %24 = arith.maximumf %22, %23 : vector<8x1xf32>
    %25 = math.sqrt %24 : vector<8x1xf32>
    %26 = arith.addf %20, %21 : vector<8x1xf32>
    %cst_17 = arith.constant 1.000000e-16 : f32
    %27 = vector.broadcast %cst_17 : f32 to vector<8x1xf32>
    %28 = arith.maximumf %26, %27 : vector<8x1xf32>
    %29 = math.sqrt %28 : vector<8x1xf32>
    %30 = arith.subf %25, %29 : vector<8x1xf32>
    %cst_18 = arith.constant 0.000000e+00 : f32
    %31 = vector.broadcast %cst_18 : f32 to vector<8x1xf32>
    %32 = arith.addf %30, %31 : vector<8x1xf32>
    %cst_19 = arith.constant 0.000000e+00 : f32
    %33 = vector.broadcast %cst_19 : f32 to vector<8x1xf32>
    %34 = arith.maximumf %32, %33 : vector<8x1xf32>
    %c0_20 = arith.constant 0 : index
    %c0_21 = arith.constant 0 : index
    %35 = vector.load %arg7[%c0_20, %c0_21] : memref<8x1xf32, #tpu.memory_space<vmem>>, vector<8x1xf32>
    tpu.vector_store %arg7[%c0_20, %c0_21], %34 {strides = array<i32>} : memref<8x1xf32, #tpu.memory_space<vmem>>, vector<8x1xf32>,
    return
  }
  func.func @transform_0(%arg0: i32) -> (i32, i32) {
    %c0_i32 = arith.constant 0 : i32
    %c0_i32_0 = arith.constant 0 : i32
    return %arg0, %c0_i32 : i32, i32
  }
  func.func @transform_1(%arg0: i32) -> (i32, i32) {
    %c0_i32 = arith.constant 0 : i32
    %c0_i32_0 = arith.constant 0 : i32
    %c0_i32_1 = arith.constant 0 : i32
    return %c0_i32, %c0_i32_0 : i32, i32
  }
  func.func @transform_2(%arg0: i32) -> (i32, i32) {
    %c0_i32 = arith.constant 0 : i32
    %c0_i32_0 = arith.constant 0 : i32
    return %arg0, %c0_i32 : i32, i32
  }
  func.func @transform_3(%arg0: i32) -> (i32, i32) {
    %c0_i32 = arith.constant 0 : i32
    %c0_i32_0 = arith.constant 0 : i32
    %c0_i32_1 = arith.constant 0 : i32
    return %c0_i32, %c0_i32_0 : i32, i32
  }
  func.func @transform_4(%arg0: i32) -> (i32, i32) {
    %c0_i32 = arith.constant 0 : i32
    %c0_i32_0 = arith.constant 0 : i32
    return %arg0, %c0_i32 : i32, i32
  }
  func.func @transform_5(%arg0: i32) -> (i32, i32) {
    %c0_i32 = arith.constant 0 : i32
    %c0_i32_0 = arith.constant 0 : i32
    %c0_i32_1 = arith.constant 0 : i32
    return %c0_i32, %c0_i32_0 : i32, i32
  }
  func.func @transform_6(%arg0: i32) -> (i32, i32) {
    %c0_i32 = arith.constant 0 : i32
    %c0_i32_0 = arith.constant 0 : i32
    return %arg0, %c0_i32 : i32, i32
  }
}

</mosaic_0001>

<llo_original>
// kernel: tpu_custom_call.1
$region0: #{tpu_custom_call.1}
  #allocation0 [shape = 'u32[]', space=smem, size = 0x4, offset = 0x4, fixed_abs, tag = 'smem constant byte address 0x4 - core index']
  #allocation1 [shape = 'u32[144,128]{1,0:T(1,128)}', space=vmem, size = 0x12000, scoped, tag = 'internal scratch']
  %s0 = inlined_call_operand.vmem [shape: f32[8,32], index: 0, kind: input, shape index: {}]
  %s1 = inlined_call_operand.vmem [shape: f32[32,8], index: 1, kind: input, shape index: {}]
  %s2 = inlined_call_operand.vmem [shape: f32[8,1], index: 2, kind: input, shape index: {}]
  %s3 = inlined_call_operand.vmem [shape: f32[1,8], index: 3, kind: input, shape index: {}]
  %s4 = inlined_call_operand.vmem [shape: s32[8,1], index: 4, kind: input, shape index: {}]
  %s5 = inlined_call_operand.vmem [shape: s32[1,8], index: 5, kind: input, shape index: {}]
  %s6 = inlined_call_operand.vmem [shape: f32[8,1], index: 6, kind: output, shape index: {}]
  %s7 = sld [smem:[#allocation0]]
  $region34: #{tpu_custom_call.1} parent=0
    _
  %s9 = ssub.s32 1, %s7
  %s10 = scalar_select 0, %s9, %s7
  // Predicated region
  $region2: #{tpu_custom_call.1} parent=0 // pred_check
    _
  $region3: #{tpu_custom_call.1} parent=0 // pred_check_branch
    %12 = sbr.rel (0) target = $region5
  $region4: #{tpu_custom_call.1} parent=0 // pred_region
    _
  $region5: #{tpu_custom_call.1} parent=0 // pred_fallthru
    _
  // Predicated region
  $region6: #{tpu_custom_call.1} parent=0 // pred_check
    _
  $region7: #{tpu_custom_call.1} parent=0 // pred_check_branch
    %14 = sbr.rel (0) target = $region9
  $region8: #{tpu_custom_call.1} parent=0 // pred_region
    _
  $region9: #{tpu_custom_call.1} parent=0 // pred_fallthru
    _
  // Predicated region
  $region10: #{tpu_custom_call.1} parent=0 // pred_check
    _
  $region11: #{tpu_custom_call.1} parent=0 // pred_check_branch
    %16 = sbr.rel (0) target = $region13
  $region12: #{tpu_custom_call.1} parent=0 // pred_region
    _
  $region13: #{tpu_custom_call.1} parent=0 // pred_fallthru
    _
  // Predicated region
  $region14: #{tpu_custom_call.1} parent=0 // pred_check
    _
  $region15: #{tpu_custom_call.1} parent=0 // pred_check_branch
    %18 = sbr.rel (0) target = $region17
  $region16: #{tpu_custom_call.1} parent=0 // pred_region
    _
  $region17: #{tpu_custom_call.1} parent=0 // pred_fallthru
    _
  // Predicated region
  $region18: #{tpu_custom_call.1} parent=0 // pred_check
    _
  $region19: #{tpu_custom_call.1} parent=0 // pred_check_branch
    %20 = sbr.rel (0) target = $region21
  $region20: #{tpu_custom_call.1} parent=0 // pred_region
    _
  $region21: #{tpu_custom_call.1} parent=0 // pred_fallthru
    _
  // Predicated region
  $region22: #{tpu_custom_call.1} parent=0 // pred_check
    _
  $region23: #{tpu_custom_call.1} parent=0 // pred_check_branch
    %22 = sbr.rel (0) target = $region25
  $region24: #{tpu_custom_call.1} parent=0 // pred_region
    _
  $region25: #{tpu_custom_call.1} parent=0 // pred_fallthru
    _
  %v23 = vld [vmem:[%s0] sm:$0xff]
  %v24 = vmul.f32 %v23, 2.0
  %v25 = vld [vmem:[%s1] sm:$0xff]
  %v26 = vld [vmem:[%s1 + $0x8] sm:$0xff]
  %v27 = vld [vmem:[%s1 + $0x10] sm:$0xff]
  %v28 = vld [vmem:[%s1 + $0x18] sm:$0xff]
  %vm29 = vcmask 261120
  %v31 = vsel %vm29, %v24, 0
  %33 = vmatprep.subr.mxu0 0.0
  %34 = vmatpush1.msra.mxu0 0.0
  %35 = vmatprep.subr.mxu0 0.0
  %36 = vmatpush1.msra.mxu0 0.0
  %37 = vmatprep.subr.mxu0 0.0
  %38 = vmatpush1.msra.mxu0 0.0
  %39 = vmatprep.subr.mxu0 0.0
  %40 = vmatpush1.msra.mxu0 0.0
  %41 = vmatprep.subr.mxu0 0.0
  %42 = vmatpush1.msra.mxu0 0.0
  %43 = vmatprep.subr.mxu0 0.0
  %44 = vmatpush1.msra.mxu0 0.0
  %45 = vmatprep.subr.mxu0 0.0
  %46 = vmatpush1.msra.mxu0 0.0
  %47 = vmatprep.subr.mxu0 0.0
  %48 = vmatpush1.msra.mxu0 0.0
  %49 = vmatprep.subr.mxu0 0.0
  %50 = vmatpush1.msra.mxu0 0.0
  %51 = vmatprep.subr.mxu0 0.0
  %52 = vmatpush1.msra.mxu0 0.0
  %53 = vmatprep.subr.mxu0 0.0
  %54 = vmatpush1.msra.mxu0 0.0
  %55 = vmatprep.subr.mxu0 0.0
  %56 = vmatpush1.msra.mxu0 0.0
  %57 = vmatprep.subr.mxu0 0.0
  %58 = vmatpush1.msra.mxu0 %v28
  %59 = vmatprep.subr.mxu0 0.0
  %60 = vmatpush1.msra.mxu0 %v27
  %61 = vmatprep.subr.mxu0 0.0
  %62 = vmatpush1.msra.mxu0 %v26
  %63 = vmatprep.subr.mxu0 0.0
  %64 = vmatpush1.msra.mxu0 %v25
  %65 = vmatprep.subr.mxu0 0.0
  %66 = vmatpush2.msra.mxu0 0.0
  %67 = vmatprep.subr.mxu0 0.0
  %68 = vmatpush2.msra.mxu0 0.0
  %69 = vmatprep.subr.mxu0 0.0
  %70 = vmatpush2.msra.mxu0 0.0
  %71 = vmatprep.subr.mxu0 0.0
  %72 = vmatpush2.msra.mxu0 0.0
  %73 = vmatprep.subr.mxu0 0.0
  %74 = vmatpush2.msra.mxu0 0.0
  %75 = vmatprep.subr.mxu0 0.0
  %76 = vmatpush2.msra.mxu0 0.0
  %77 = vmatprep.subr.mxu0 0.0
  %78 = vmatpush2.msra.mxu0 0.0
  %79 = vmatprep.subr.mxu0 0.0
  %80 = vmatpush2.msra.mxu0 0.0
  %81 = vmatprep.subr.mxu0 0.0
  %82 = vmatpush2.msra.mxu0 0.0
  %83 = vmatprep.subr.mxu0 0.0
  %84 = vmatpush2.msra.mxu0 0.0
  %85 = vmatprep.subr.mxu0 0.0
  %86 = vmatpush2.msra.mxu0 0.0
  %87 = vmatprep.subr.mxu0 0.0
  %88 = vmatpush2.msra.mxu0 0.0
  %89 = vmatprep.subr.mxu0 0.0
  %90 = vmatpush2.msra.mxu0 0.0
  %91 = vmatprep.subr.mxu0 0.0
  %92 = vmatpush2.msra.mxu0 0.0
  %93 = vmatprep.subr.mxu0 0.0
  %94 = vmatpush2.msra.mxu0 0.0
  %95 = vmatprep.subr.mxu0 0.0
  %96 = vmatpush2.msra.mxu0 0.0
  %97 = vmatprep.mubr.f32.mxu0 0.0
  %98 = vmatmul.mubr.f32.gmra.mxu0 %v31
  %v99 = vpop.f32.mrf.mxu0
  %v100 = vadd.f32 0.0, %v99
  %v101 = vpop.f32.mrf.mxu0
  %102 = vdwg.mxu0
  %v103 = vld [vmem:[%s3] sm:$0x1]
  %v105 = vlaneseq
  %v106 = vshrl.u32 %v105, 7
  %v107 = vsub.s32 0, %v106
  %v108 = vrot.slane %v103, %v107
  %v110 = vsub.f32 %v108, %v100
  %v111 = vld [vmem:[%s4] sm:$0xff]
  %v112 = vld [vmem:[%s5] sm:$0x1]
  %113 = vset.pattern.permute.xlu0 0
  %114 = vperm.xlu0 %113, %v111
  %v115 = vpop.permute.xlu0 %114
  %v116 = vlaneseq
  %v117 = vshrl.u32 %v116, 7
  %v118 = vsub.s32 0, %v117
  %v119 = vrot.slane %v112, %v118
  %vm120 = vcmp.eq.s32.totalorder %v115, %v119
  %v121 = vsel %vm120, %v110, -inf
  %vm122 = vcmask 64512
  %v123 = vsel %vm122, %v121, -inf
  %124 = vmax.xlane.f32.xlu0 %v123
  %v125 = vpop.xlane.xlu0 %124
  %v126 = vsel %vm120, inf, %v110
  %v127 = vsel %vm122, %v126, inf
  %128 = vmin.xlane.f32.xlu0 %v127
  %v129 = vpop.xlane.xlu0 %128
  %v130 = vld [vmem:[%s2] sm:$0xff]
  %v131 = vadd.f32 %v125, %v130
  %v132 = vmax.f32 %v131, 1e-16
  %v133 = vrsqrt.pop %v132
  %v134 = vmul.f32 %v132, %v133
  %vm135 = vcmp.eq.f32.partialorder %v132, inf
  %v136 = vsel %vm135, %v132, %v134
  %vm137 = vcmp.eq.f32.partialorder %v132, 0.0
  %v138 = vand.u32 %v132, 2147483648
  %v139 = vsel %vm137, %v138, %v136
  %v140 = vadd.f32 %v129, %v130
  %v141 = vmax.f32 %v140, 1e-16
  %v142 = vrsqrt.pop %v141
  %v143 = vmul.f32 %v141, %v142
  %vm144 = vcmp.eq.f32.partialorder %v141, inf
  %v145 = vsel %vm144, %v141, %v143
  %vm146 = vcmp.eq.f32.partialorder %v141, 0.0
  %v147 = vand.u32 %v141, 2147483648
  %v148 = vsel %vm146, %v147, %v145
  %v149 = vsub.f32 %v139, %v148
  %v150 = vadd.f32 %v149, 0.0
  %v151 = vmax.f32 %v150, 0.0
  %vm152 = vcmask 7168
  %153 = vst.msk [vmem:[%s6] sm:$0xff] %vm152, %v151
  // Predicated region
  $region26: #{tpu_custom_call.1} parent=0 // pred_check
    _
  $region27: #{tpu_custom_call.1} parent=0 // pred_check_branch
    %155 = sbr.rel (0) target = $region29
  $region28: #{tpu_custom_call.1} parent=0 // pred_region
    _
  $region29: #{tpu_custom_call.1} parent=0 // pred_fallthru
    _
  // Predicated region
  $region30: #{tpu_custom_call.1} parent=0 // pred_check
    _
  $region31: #{tpu_custom_call.1} parent=0 // pred_check_branch
    %157 = sbr.rel (0) target = $region33
  $region32: #{tpu_custom_call.1} parent=0 // pred_region
    _
  $region33: #{tpu_custom_call.1} parent=0 // pred_fallthru
    _

</llo_original>
